<compile_context>
chip_gen: v7x
topology: tpu7x:2x2x1
jax: 0.10.0
libtpu: 0.0.40
codegen_flags: <defaults>
</compile_context>

<pallas_src>
import jax
import jax.numpy as jnp
from jax import lax
from jax.experimental import pallas as pl
from jax.experimental.pallas import tpu as pltpu


def _round_up(n, m):
    return ((n + m - 1) // m) * m


def _mlp_kernel(x_ref, w1_ref, b1_ref, w2_ref, b2_ref, w3_ref, b3_ref, o_ref):
    x = x_ref[...]                                              # [TB, 26]

    # fc1 + ReLU (MXU matmul, f32 accumulation)
    h = jnp.dot(x, w1_ref[...], preferred_element_type=jnp.float32)
    h = jnp.maximum(h + b1_ref[...], 0.0)                       # [TB, H]

    # fc2 + ReLU
    h = jnp.dot(h, w2_ref[...], preferred_element_type=jnp.float32)
    h = jnp.maximum(h + b2_ref[...], 0.0)                       # [TB, H]

    # fc3: contract the (tiny) hidden axis of h against the w3 row so the
    # result comes out as [1, TB] -- batch lands on the 128-lane axis and the
    # output store is lane-dense (no masked 1/128-lane vst).
    z = lax.dot_general(
        w3_ref[...], h,                                         # [1,H] x [TB,H]
        dimension_numbers=(((1,), (1,)), ((), ())),             # trans-B
        preferred_element_type=jnp.float32,
    )                                                           # [1, TB]
    z = z + b3_ref[...]                                         # [1,1] broadcast

    # Sigmoid via tanh -> EUP slot (keeps the epilogue off the VALU divide).
    y = 0.5 * (jnp.tanh(0.5 * z) + 1.0)
    o_ref[...] = y[None].astype(o_ref.dtype)                    # [1, 1, TB]


def genetic_algorithm_forward(x, params, *, tb_max=4096):
    """x: [B, 26] float32; params: w1(26,H), b1(1,H), w2(H,H), b2(1,H),
    w3(1,H), b3(1,1).  Returns [B, 1] float32."""
    w1, b1 = params["w1"], params["b1"]
    w2, b2 = params["w2"], params["b2"]
    w3, b3 = params["w3"], params["b3"]

    B, f_in = x.shape
    H = w1.shape[1]

    # Batch tile: multiple of 128 so the x block's sublane axis is aligned and
    # the lane-dense output block is a whole number of vregs.  Large tiles
    # amortize the ~0.35 us per-grid-step overhead; VMEM use stays tiny
    # (4096*26*4 B ~ 0.4 MiB per x buffer).
    TB = min(tb_max, _round_up(B, 128))
    B_pad = _round_up(B, TB)
    G = B_pad // TB
    if B_pad != B:
        x = jnp.pad(x, ((0, B_pad - B), (0, 0)))

    def resident(shape):
        n = len(shape)
        return pl.BlockSpec(shape, lambda i, n=n: (0,) * n)

    cost = pl.CostEstimate(
        flops=2 * B_pad * (f_in * H + H * H + H),
        transcendentals=B_pad,
        bytes_accessed=4 * (B_pad * (f_in + 1) + f_in * H + H * H + 3 * H + 1),
    )

    out = pl.pallas_call(
        _mlp_kernel,
        out_shape=jax.ShapeDtypeStruct((G, 1, TB), jnp.float32),
        grid=(G,),
        in_specs=[
            pl.BlockSpec((TB, f_in), lambda i: (i, 0)),   # x: streamed per tile
            resident(w1.shape), resident(b1.shape),       # weights stay in VMEM
            resident(w2.shape), resident(b2.shape),
            resident(w3.shape), resident(b3.shape),
        ],
        out_specs=pl.BlockSpec((1, 1, TB), lambda i: (i, 0, 0)),
        compiler_params=pltpu.CompilerParams(
            dimension_semantics=("parallel",),            # v7x megacore sharding
            vmem_limit_bytes=32 * 1024 * 1024,
        ),
        cost_estimate=cost,
    )(x, w1, b1, w2, b2, w3, b3)

    # (G, 1, TB) lane-dense slab -> (B, 1); row index = g*TB + t.
    return out.reshape(B_pad, 1)[:B]


def init_params(key, hidden_size=15, in_features=26):
    """Deterministic synthetic parameters (PyTorch nn.Linear-style uniform)."""
    ks = jax.random.split(key, 6)

    def linear(kw, kb, fan_in, fan_out):
        bound = 1.0 / (fan_in ** 0.5)
        w = jax.random.uniform(kw, (fan_in, fan_out), jnp.float32, -bound, bound)
        b = jax.random.uniform(kb, (1, fan_out), jnp.float32, -bound, bound)
        return w, b

    w1, b1 = linear(ks[0], ks[1], in_features, hidden_size)
    w2, b2 = linear(ks[2], ks[3], hidden_size, hidden_size)
    w3c, b3 = linear(ks[4], ks[5], hidden_size, 1)        # (H,1), (1,1)
    return {"w1": w1, "b1": b1, "w2": w2, "b2": b2,
            "w3": w3c.T, "b3": b3}                        # w3 as (1, H) row


def _reference(x, p):
    h = jnp.maximum(x @ p["w1"] + p["b1"], 0.0)
    h = jnp.maximum(h @ p["w2"] + p["b2"], 0.0)
    return jax.nn.sigmoid(h @ p["w3"].T + p["b3"])


if __name__ == "__main__":
    key = jax.random.PRNGKey(0)
    k_x, k_x2, k_p = jax.random.split(key, 3)

    batch, in_features, hidden = 8, 26, 15
    params = init_params(k_p, hidden_size=hidden, in_features=in_features)

    # Small batch (single tile, padded to 128 rows).
    x = jax.random.normal(k_x, (batch, in_features), dtype=jnp.float32)
    out = jax.block_until_ready(genetic_algorithm_forward(x, params))
    ref = _reference(x, params)
    assert out.shape == (batch, 1)
    assert jnp.allclose(out, ref, atol=1e-5, rtol=1e-5)

    # Exercise the multi-step grid (G > 1) and batch padding paths.
    x2 = jax.random.normal(k_x2, (300, in_features), dtype=jnp.float32)
    out2 = jax.block_until_ready(
        genetic_algorithm_forward(x2, params, tb_max=128))
    ref2 = _reference(x2, params)
    assert out2.shape == (300, 1)
    assert jnp.allclose(out2, ref2, atol=1e-5, rtol=1e-5)

    print("KERNEL_OK")
</pallas_src>

<mosaic_0001>
module attributes {stable_mosaic.version = 11 : i64} {
  func.func @_mlp_kernel(%arg0: i32, %arg1: memref<128x26xf32, #tpu.memory_space<vmem>>, %arg2: memref<26x15xf32, #tpu.memory_space<vmem>>, %arg3: memref<1x15xf32, #tpu.memory_space<vmem>>, %arg4: memref<15x15xf32, #tpu.memory_space<vmem>>, %arg5: memref<1x15xf32, #tpu.memory_space<vmem>>, %arg6: memref<1x15xf32, #tpu.memory_space<vmem>>, %arg7: memref<1x1xf32, #tpu.memory_space<vmem>>, %arg8: memref<1x1x128xf32, #tpu.memory_space<vmem>>) attributes {dimension_semantics = [#tpu.dimension_semantics<parallel>], iteration_bounds = array<i64: 1>, scalar_prefetch = 0 : i64, scratch_operands = 0 : i64, tpu.core_type = #tpu.core_type<tc>, window_params = [{transform_indices = @transform_0, window_bounds = array<i64: 128, 26>}, {pipeline_mode = #tpu.pipeline_mode<synchronous>, transform_indices = @transform_1, window_bounds = array<i64: 26, 15>}, {pipeline_mode = #tpu.pipeline_mode<synchronous>, transform_indices = @transform_2, window_bounds = array<i64: 1, 15>}, {pipeline_mode = #tpu.pipeline_mode<synchronous>, transform_indices = @transform_3, window_bounds = array<i64: 15, 15>}, {pipeline_mode = #tpu.pipeline_mode<synchronous>, transform_indices = @transform_4, window_bounds = array<i64: 1, 15>}, {pipeline_mode = #tpu.pipeline_mode<synchronous>, transform_indices = @transform_5, window_bounds = array<i64: 1, 15>}, {pipeline_mode = #tpu.pipeline_mode<synchronous>, transform_indices = @transform_6, window_bounds = array<i64: 1, 1>}, {transform_indices = @transform_7, window_bounds = array<i64: 1, 1, 128>}]} {
    %c0 = arith.constant 0 : index
    %c0_0 = arith.constant 0 : index
    %0 = vector.load %arg1[%c0, %c0_0] : memref<128x26xf32, #tpu.memory_space<vmem>>, vector<128x26xf32>
    %c0_1 = arith.constant 0 : index
    %c0_2 = arith.constant 0 : index
    %1 = vector.load %arg2[%c0_1, %c0_2] : memref<26x15xf32, #tpu.memory_space<vmem>>, vector<26x15xf32>
    %cst = arith.constant dense<0.000000e+00> : vector<128x15xf32>
    %2 = tpu.matmul %0, %1, %cst {dimension_numbers = #tpu.dot_dimension_numbers<[1], [0], [0], [1], [0, 0, 1, 1], [], []>} : vector<128x26xf32>, vector<26x15xf32>, vector<128x15xf32> -> vector<128x15xf32>
    %c0_3 = arith.constant 0 : index
    %c0_4 = arith.constant 0 : index
    %3 = vector.load %arg3[%c0_3, %c0_4] : memref<1x15xf32, #tpu.memory_space<vmem>>, vector<1x15xf32>
    %4 = vector.broadcast %3 : vector<1x15xf32> to vector<128x15xf32>
    %5 = arith.addf %2, %4 : vector<128x15xf32>
    %cst_5 = arith.constant 0.000000e+00 : f32
    %6 = vector.broadcast %cst_5 : f32 to vector<128x15xf32>
    %7 = arith.maximumf %5, %6 : vector<128x15xf32>
    %c0_6 = arith.constant 0 : index
    %c0_7 = arith.constant 0 : index
    %8 = vector.load %arg4[%c0_6, %c0_7] : memref<15x15xf32, #tpu.memory_space<vmem>>, vector<15x15xf32>
    %cst_8 = arith.constant dense<0.000000e+00> : vector<128x15xf32>
    %9 = tpu.matmul %7, %8, %cst_8 {dimension_numbers = #tpu.dot_dimension_numbers<[1], [0], [0], [1], [0, 0, 1, 1], [], []>} : vector<128x15xf32>, vector<15x15xf32>, vector<128x15xf32> -> vector<128x15xf32>
    %c0_9 = arith.constant 0 : index
    %c0_10 = arith.constant 0 : index
    %10 = vector.load %arg5[%c0_9, %c0_10] : memref<1x15xf32, #tpu.memory_space<vmem>>, vector<1x15xf32>
    %11 = vector.broadcast %10 : vector<1x15xf32> to vector<128x15xf32>
    %12 = arith.addf %9, %11 : vector<128x15xf32>
    %cst_11 = arith.constant 0.000000e+00 : f32
    %13 = vector.broadcast %cst_11 : f32 to vector<128x15xf32>
    %14 = arith.maximumf %12, %13 : vector<128x15xf32>
    %c0_12 = arith.constant 0 : index
    %c0_13 = arith.constant 0 : index
    %15 = vector.load %arg6[%c0_12, %c0_13] : memref<1x15xf32, #tpu.memory_space<vmem>>, vector<1x15xf32>
    %cst_14 = arith.constant dense<0.000000e+00> : vector<1x128xf32>
    %16 = tpu.matmul %15, %14, %cst_14 {dimension_numbers = #tpu.dot_dimension_numbers<[1], [1], [0], [0], [0, 0, 1, 0], [], []>} : vector<1x15xf32>, vector<128x15xf32>, vector<1x128xf32> -> vector<1x128xf32>
    %c0_15 = arith.constant 0 : index
    %c0_16 = arith.constant 0 : index
    %17 = vector.load %arg7[%c0_15, %c0_16] : memref<1x1xf32, #tpu.memory_space<vmem>>, vector<1x1xf32>
    %18 = vector.broadcast %17 : vector<1x1xf32> to vector<1x128xf32>
    %19 = arith.addf %16, %18 : vector<1x128xf32>
    %cst_17 = arith.constant 5.000000e-01 : f32
    %20 = vector.broadcast %cst_17 : f32 to vector<1x128xf32>
    %21 = arith.mulf %20, %19 : vector<1x128xf32>
    %22 = math.tanh %21 : vector<1x128xf32>
    %cst_18 = arith.constant 1.000000e+00 : f32
    %23 = vector.broadcast %cst_18 : f32 to vector<1x128xf32>
    %24 = arith.addf %22, %23 : vector<1x128xf32>
    %cst_19 = arith.constant 5.000000e-01 : f32
    %25 = vector.broadcast %cst_19 : f32 to vector<1x128xf32>
    %26 = arith.mulf %25, %24 : vector<1x128xf32>
    %27 = vector.shape_cast %26 : vector<1x128xf32> to vector<1x1x128xf32>
    %c0_20 = arith.constant 0 : index
    %c0_21 = arith.constant 0 : index
    %c0_22 = arith.constant 0 : index
    %28 = vector.load %arg8[%c0_20, %c0_21, %c0_22] : memref<1x1x128xf32, #tpu.memory_space<vmem>>, vector<1x1x128xf32>
    tpu.vector_store %arg8[%c0_20, %c0_21, %c0_22], %27 {strides = array<i32>} : memref<1x1x128xf32, #tpu.memory_space<vmem>>, vector<1x1x128xf32>,
    return
  }
  func.func @transform_0(%arg0: i32) -> (i32, i32) {
    %c0_i32 = arith.constant 0 : i32
    %c0_i32_0 = arith.constant 0 : i32
    return %arg0, %c0_i32 : i32, i32
  }
  func.func @transform_1(%arg0: i32) -> (i32, i32) {
    %c0_i32 = arith.constant 0 : i32
    %c0_i32_0 = arith.constant 0 : i32
    %c0_i32_1 = arith.constant 0 : i32
    return %c0_i32, %c0_i32_0 : i32, i32
  }
  func.func @transform_2(%arg0: i32) -> (i32, i32) {
    %c0_i32 = arith.constant 0 : i32
    %c0_i32_0 = arith.constant 0 : i32
    %c0_i32_1 = arith.constant 0 : i32
    return %c0_i32, %c0_i32_0 : i32, i32
  }
  func.func @transform_3(%arg0: i32) -> (i32, i32) {
    %c0_i32 = arith.constant 0 : i32
    %c0_i32_0 = arith.constant 0 : i32
    %c0_i32_1 = arith.constant 0 : i32
    return %c0_i32, %c0_i32_0 : i32, i32
  }
  func.func @transform_4(%arg0: i32) -> (i32, i32) {
    %c0_i32 = arith.constant 0 : i32
    %c0_i32_0 = arith.constant 0 : i32
    %c0_i32_1 = arith.constant 0 : i32
    return %c0_i32, %c0_i32_0 : i32, i32
  }
  func.func @transform_5(%arg0: i32) -> (i32, i32) {
    %c0_i32 = arith.constant 0 : i32
    %c0_i32_0 = arith.constant 0 : i32
    %c0_i32_1 = arith.constant 0 : i32
    return %c0_i32, %c0_i32_0 : i32, i32
  }
  func.func @transform_6(%arg0: i32) -> (i32, i32) {
    %c0_i32 = arith.constant 0 : i32
    %c0_i32_0 = arith.constant 0 : i32
    %c0_i32_1 = arith.constant 0 : i32
    return %c0_i32, %c0_i32_0 : i32, i32
  }
  func.func @transform_7(%arg0: i32) -> (i32, i32, i32) {
    %c0_i32 = arith.constant 0 : i32
    %c0_i32_0 = arith.constant 0 : i32
    %c0_i32_1 = arith.constant 0 : i32
    return %arg0, %c0_i32, %c0_i32_0 : i32, i32, i32
  }
}

</mosaic_0001>

<llo_original>
// kernel: tpu_custom_call.1
$region0: #{tpu_custom_call.1}
  #allocation0 [shape = 'u32[]', space=smem, size = 0x4, offset = 0x4, fixed_abs, tag = 'smem constant byte address 0x4 - core index']
  #allocation1 [shape = 'u32[144,128]{1,0:T(1,128)}', space=vmem, size = 0x12000, scoped, tag = 'internal scratch']
  #allocation2 [shape = 'f32[1,1]{1,0:T(1,128)S(1)}', space=vmem, size = 0x200, scoped, tag = 'scoped memory for tpu_custom_call.1']
  %s0 = inlined_call_operand.vmem [shape: f32[128,26], index: 0, kind: input, shape index: {}]
  %s1 = inlined_call_operand.vmem [shape: f32[26,15], index: 1, kind: input, shape index: {}]
  %s2 = inlined_call_operand.vmem [shape: f32[1,15], index: 2, kind: input, shape index: {}]
  %s3 = inlined_call_operand.vmem [shape: f32[15,15], index: 3, kind: input, shape index: {}]
  %s4 = inlined_call_operand.vmem [shape: f32[1,15], index: 4, kind: input, shape index: {}]
  %s5 = inlined_call_operand.vmem [shape: f32[1,15], index: 5, kind: input, shape index: {}]
  %s6 = inlined_call_operand.<no memory space> [shape: f32[1,1], index: 6, kind: input, shape index: {}]
  %s7 = inlined_call_operand.hbm [shape: f32[1,1,128], index: 7, kind: output, shape index: {}]
  %s8 = sld [smem:[#allocation0]]
  $region38: #{tpu_custom_call.1} parent=0
    _
  %s10 = ssub.s32 1, %s8
  %s11 = scalar_select 0, %s10, %s8
  %v12 = vstv %s6
  %13 = vst [vmem:[#allocation2] sm:$0x1] %v12
  $region1: #{tpu_custom_call.1} parent=0
    #allocation3 [shape = 'u8[512]{0}', space=vmem, size = 0x400, scoped, tag = 'output window, operand 0, single buffered']
    #allocation4 [shape = 's32[1]{0}', space=sflag, size = 0x4, scoped, tag = 'scoped memory for tpu_custom_call.1']
    %14 = vsyncpa [#allocation4], 0
    // Predicated region
    $region2: #{tpu_custom_call.1} parent=1 // pred_check
      _
    $region3: #{tpu_custom_call.1} parent=1 // pred_check_branch
      %16 = sbr.rel (0) target = $region5
    $region4: #{tpu_custom_call.1} parent=1 // pred_region
      _
    $region5: #{tpu_custom_call.1} parent=1 // pred_fallthru
      _
    // Predicated region
    $region6: #{tpu_custom_call.1} parent=1 // pred_check
      _
    $region7: #{tpu_custom_call.1} parent=1 // pred_check_branch
      %18 = sbr.rel (0) target = $region9
    $region8: #{tpu_custom_call.1} parent=1 // pred_region
      _
    $region9: #{tpu_custom_call.1} parent=1 // pred_fallthru
      _
    // Predicated region
    $region10: #{tpu_custom_call.1} parent=1 // pred_check
      _
    $region11: #{tpu_custom_call.1} parent=1 // pred_check_branch
      %20 = sbr.rel (0) target = $region13
    $region12: #{tpu_custom_call.1} parent=1 // pred_region
      _
    $region13: #{tpu_custom_call.1} parent=1 // pred_fallthru
      _
    // Predicated region
    $region14: #{tpu_custom_call.1} parent=1 // pred_check
      _
    $region15: #{tpu_custom_call.1} parent=1 // pred_check_branch
      %22 = sbr.rel (0) target = $region17
    $region16: #{tpu_custom_call.1} parent=1 // pred_region
      _
    $region17: #{tpu_custom_call.1} parent=1 // pred_fallthru
      _
    // Predicated region
    $region18: #{tpu_custom_call.1} parent=1 // pred_check
      _
    $region19: #{tpu_custom_call.1} parent=1 // pred_check_branch
      %24 = sbr.rel (0) target = $region21
    $region20: #{tpu_custom_call.1} parent=1 // pred_region
      _
    $region21: #{tpu_custom_call.1} parent=1 // pred_fallthru
      _
    // Predicated region
    $region22: #{tpu_custom_call.1} parent=1 // pred_check
      _
    $region23: #{tpu_custom_call.1} parent=1 // pred_check_branch
      %26 = sbr.rel (0) target = $region25
    $region24: #{tpu_custom_call.1} parent=1 // pred_region
      _
    $region25: #{tpu_custom_call.1} parent=1 // pred_fallthru
      _
    // Predicated region
    $region26: #{tpu_custom_call.1} parent=1 // pred_check
      _
    $region27: #{tpu_custom_call.1} parent=1 // pred_check_branch
      %28 = sbr.rel (0) target = $region29
    $region28: #{tpu_custom_call.1} parent=1 // pred_region
      _
    $region29: #{tpu_custom_call.1} parent=1 // pred_fallthru
      _
    %v29 = vld [vmem:[%s0] sm:$0xff]
    %v30 = vld [vmem:[%s0 + $0x8] sm:$0xff]
    %v31 = vld [vmem:[%s0 + $0x10] sm:$0xff]
    %v32 = vld [vmem:[%s0 + $0x18] sm:$0xff]
    %v33 = vld [vmem:[%s0 + $0x20] sm:$0xff]
    %v34 = vld [vmem:[%s0 + $0x28] sm:$0xff]
    %v35 = vld [vmem:[%s0 + $0x30] sm:$0xff]
    %v36 = vld [vmem:[%s0 + $0x38] sm:$0xff]
    %v37 = vld [vmem:[%s0 + $0x40] sm:$0xff]
    %v38 = vld [vmem:[%s0 + $0x48] sm:$0xff]
    %v39 = vld [vmem:[%s0 + $0x50] sm:$0xff]
    %v40 = vld [vmem:[%s0 + $0x58] sm:$0xff]
    %v41 = vld [vmem:[%s0 + $0x60] sm:$0xff]
    %v42 = vld [vmem:[%s0 + $0x68] sm:$0xff]
    %v43 = vld [vmem:[%s0 + $0x70] sm:$0xff]
    %v44 = vld [vmem:[%s0 + $0x78] sm:$0xff]
    %v45 = vld [vmem:[%s1] sm:$0xff]
    %v46 = vld [vmem:[%s1 + $0x8] sm:$0xff]
    %v47 = vld [vmem:[%s1 + $0x10] sm:$0xff]
    %v48 = vld [vmem:[%s1 + $0x18] sm:$0x3]
    %v49 = vld [vmem:[%s2] sm:$0x1]
    %v51 = vlaneseq
    %v52 = vshrl.u32 %v51, 7
    %v53 = vsub.s32 0, %v52
    %v54 = vrot.slane %v49, %v53
    %vm56 = vcmask 211968
    %v58 = vsel %vm56, %v29, 0
    %v61 = vsel %vm56, %v30, 0
    %v64 = vsel %vm56, %v31, 0
    %v67 = vsel %vm56, %v32, 0
    %v70 = vsel %vm56, %v33, 0
    %v73 = vsel %vm56, %v34, 0
    %v76 = vsel %vm56, %v35, 0
    %v79 = vsel %vm56, %v36, 0
    %v82 = vsel %vm56, %v37, 0
    %v85 = vsel %vm56, %v38, 0
    %v88 = vsel %vm56, %v39, 0
    %v91 = vsel %vm56, %v40, 0
    %v94 = vsel %vm56, %v41, 0
    %v97 = vsel %vm56, %v42, 0
    %v100 = vsel %vm56, %v43, 0
    %v103 = vsel %vm56, %v44, 0
    %vm105 = vcmask 1041408
    %v107 = vsel %vm105, %v48, 0
    %109 = vmatprep.subr.mxu0 0.0
    %110 = vmatpush1.msra.mxu0 %v45
    %111 = vmatprep.subr.mxu0 0.0
    %112 = vmatpush1.msra.mxu0 %v46
    %113 = vmatprep.subr.mxu0 0.0
    %114 = vmatpush1.msra.mxu0 %v47
    %115 = vmatprep.subr.mxu0 0.0
    %116 = vmatpush1.msra.mxu0 %v107
    %117 = vmatprep.subr.mxu0 0.0
    %118 = vmatpush1.msra.mxu0 0.0
    %119 = vmatprep.subr.mxu0 0.0
    %120 = vmatpush1.msra.mxu0 0.0
    %121 = vmatprep.subr.mxu0 0.0
    %122 = vmatpush1.msra.mxu0 0.0
    %123 = vmatprep.subr.mxu0 0.0
    %124 = vmatpush1.msra.mxu0 0.0
    %125 = vmatprep.subr.mxu0 0.0
    %126 = vmatpush1.msra.mxu0 0.0
    %127 = vmatprep.subr.mxu0 0.0
    %128 = vmatpush1.msra.mxu0 0.0
    %129 = vmatprep.subr.mxu0 0.0
    %130 = vmatpush1.msra.mxu0 0.0
    %131 = vmatprep.subr.mxu0 0.0
    %132 = vmatpush1.msra.mxu0 0.0
    %133 = vmatprep.subr.mxu0 0.0
    %134 = vmatpush1.msra.mxu0 0.0
    %135 = vmatprep.subr.mxu0 0.0
    %136 = vmatpush1.msra.mxu0 0.0
    %137 = vmatprep.subr.mxu0 0.0
    %138 = vmatpush1.msra.mxu0 0.0
    %139 = vmatprep.subr.mxu0 0.0
    %140 = vmatpush1.msra.mxu0 0.0
    %141 = vmatprep.subr.mxu0 0.0
    %142 = vmatpush1.msra.mxu0 0.0
    %143 = vmatprep.subr.mxu0 0.0
    %144 = vmatpush1.msra.mxu0 0.0
    %145 = vmatprep.subr.mxu0 0.0
    %146 = vmatpush1.msra.mxu0 0.0
    %147 = vmatprep.subr.mxu0 0.0
    %148 = vmatpush1.msra.mxu0 0.0
    %149 = vmatprep.subr.mxu0 0.0
    %150 = vmatpush1.msra.mxu0 0.0
    %151 = vmatprep.subr.mxu0 0.0
    %152 = vmatpush1.msra.mxu0 0.0
    %153 = vmatprep.subr.mxu0 0.0
    %154 = vmatpush1.msra.mxu0 0.0
    %155 = vmatprep.subr.mxu0 0.0
    %156 = vmatpush1.msra.mxu0 0.0
    %157 = vmatprep.subr.mxu0 0.0
    %158 = vmatpush1.msra.mxu0 0.0
    %159 = vmatprep.subr.mxu0 0.0
    %160 = vmatpush1.msra.mxu0 0.0
    %161 = vmatprep.subr.mxu0 0.0
    %162 = vmatpush1.msra.mxu0 0.0
    %163 = vmatprep.subr.mxu0 0.0
    %164 = vmatpush1.msra.mxu0 0.0
    %165 = vmatprep.subr.mxu0 0.0
    %166 = vmatpush1.msra.mxu0 0.0
    %167 = vmatprep.subr.mxu0 0.0
    %168 = vmatpush1.msra.mxu0 0.0
    %169 = vmatprep.subr.mxu0 0.0
    %170 = vmatpush1.msra.mxu0 0.0
    %171 = vmatprep.subr.mxu0 0.0
    %172 = vmatpush1.msra.mxu0 0.0
    %173 = vmatprep.mubr.f32.mxu0 0.0
    %174 = vmatmul.mubr.f32.gmra.mrb[0].mxu0 %v58
    %v175 = vpop.f32.mrb[0].mxu0
    %v176 = vadd.f32 %v54, %v175
    %v177 = vpop.f32.mrb[0].mxu0
    %178 = vmatprep.mubr.f32.mxu0 0.0
    %179 = vmatmul.mubr.f32.gmra.mrb[0].mxu0 %v61
    %v180 = vpop.f32.mrb[0].mxu0
    %v181 = vadd.f32 %v54, %v180
    %v182 = vpop.f32.mrb[0].mxu0
    %183 = vmatprep.mubr.f32.mxu0 0.0
    %184 = vmatmul.mubr.f32.gmra.mrb[0].mxu0 %v64
    %v185 = vpop.f32.mrb[0].mxu0
    %v186 = vadd.f32 %v54, %v185
    %v187 = vpop.f32.mrb[0].mxu0
    %188 = vmatprep.mubr.f32.mxu0 0.0
    %189 = vmatmul.mubr.f32.gmra.mrb[0].mxu0 %v67
    %v190 = vpop.f32.mrb[0].mxu0
    %v191 = vadd.f32 %v54, %v190
    %v192 = vpop.f32.mrb[0].mxu0
    %193 = vmatprep.mubr.f32.mxu0 0.0
    %194 = vmatmul.mubr.f32.gmra.mrb[0].mxu0 %v70
    %v195 = vpop.f32.mrb[0].mxu0
    %v196 = vadd.f32 %v54, %v195
    %v197 = vpop.f32.mrb[0].mxu0
    %198 = vmatprep.mubr.f32.mxu0 0.0
    %199 = vmatmul.mubr.f32.gmra.mrb[0].mxu0 %v73
    %v200 = vpop.f32.mrb[0].mxu0
    %v201 = vadd.f32 %v54, %v200
    %v202 = vpop.f32.mrb[0].mxu0
    %203 = vmatprep.mubr.f32.mxu0 0.0
    %204 = vmatmul.mubr.f32.gmra.mrb[0].mxu0 %v76
    %v205 = vpop.f32.mrb[0].mxu0
    %v206 = vadd.f32 %v54, %v205
    %v207 = vpop.f32.mrb[0].mxu0
    %208 = vmatprep.mubr.f32.mxu0 0.0
    %209 = vmatmul.mubr.f32.gmra.mrb[0].mxu0 %v79
    %v210 = vpop.f32.mrb[0].mxu0
    %v211 = vadd.f32 %v54, %v210
    %v212 = vpop.f32.mrb[0].mxu0
    %213 = vmatprep.mubr.f32.mxu0 0.0
    %214 = vmatmul.mubr.f32.gmra.mrb[0].mxu0 %v82
    %v215 = vpop.f32.mrb[0].mxu0
    %v216 = vadd.f32 %v54, %v215
    %v217 = vpop.f32.mrb[0].mxu0
    %218 = vmatprep.mubr.f32.mxu0 0.0
    %219 = vmatmul.mubr.f32.gmra.mrb[0].mxu0 %v85
    %v220 = vpop.f32.mrb[0].mxu0
    %v221 = vadd.f32 %v54, %v220
    %v222 = vpop.f32.mrb[0].mxu0
    %223 = vmatprep.mubr.f32.mxu0 0.0
    %224 = vmatmul.mubr.f32.gmra.mrb[0].mxu0 %v88
    %v225 = vpop.f32.mrb[0].mxu0
    %v226 = vadd.f32 %v54, %v225
    %v227 = vpop.f32.mrb[0].mxu0
    %228 = vmatprep.mubr.f32.mxu0 0.0
    %229 = vmatmul.mubr.f32.gmra.mrb[0].mxu0 %v91
    %v230 = vpop.f32.mrb[0].mxu0
    %v231 = vadd.f32 %v54, %v230
    %v232 = vpop.f32.mrb[0].mxu0
    %233 = vmatprep.mubr.f32.mxu0 0.0
    %234 = vmatmul.mubr.f32.gmra.mrb[0].mxu0 %v94
    %v235 = vpop.f32.mrb[0].mxu0
    %v236 = vadd.f32 %v54, %v235
    %v237 = vpop.f32.mrb[0].mxu0
    %238 = vmatprep.mubr.f32.mxu0 0.0
    %239 = vmatmul.mubr.f32.gmra.mrb[0].mxu0 %v97
    %v240 = vpop.f32.mrb[0].mxu0
    %v241 = vadd.f32 %v54, %v240
    %v242 = vpop.f32.mrb[0].mxu0
    %243 = vmatprep.mubr.f32.mxu0 0.0
    %244 = vmatmul.mubr.f32.gmra.mrb[0].mxu0 %v100
    %v245 = vpop.f32.mrb[0].mxu0
    %v246 = vadd.f32 %v54, %v245
    %v247 = vpop.f32.mrb[0].mxu0
    %248 = vmatprep.mubr.f32.mxu0 0.0
    %249 = vmatmul.mubr.f32.gmra.mrb[0].mxu0 %v103
    %v250 = vpop.f32.mrb[0].mxu0
    %v251 = vadd.f32 %v54, %v250
    %v252 = vpop.f32.mrb[0].mxu0
    %253 = vdwg.mxu0
    %v254 = vmax.f32 %v176, 0.0
    %v255 = vmax.f32 %v181, 0.0
    %v256 = vmax.f32 %v186, 0.0
    %v257 = vmax.f32 %v191, 0.0
    %v258 = vmax.f32 %v196, 0.0
    %v259 = vmax.f32 %v201, 0.0
    %v260 = vmax.f32 %v206, 0.0
    %v261 = vmax.f32 %v211, 0.0
    %v262 = vmax.f32 %v216, 0.0
    %v263 = vmax.f32 %v221, 0.0
    %v264 = vmax.f32 %v226, 0.0
    %v265 = vmax.f32 %v231, 0.0
    %v266 = vmax.f32 %v236, 0.0
    %v267 = vmax.f32 %v241, 0.0
    %v268 = vmax.f32 %v246, 0.0
    %v269 = vmax.f32 %v251, 0.0
    %v270 = vld [vmem:[%s3] sm:$0xff]
    %v271 = vld [vmem:[%s3 + $0x8] sm:$0x7f]
    %v272 = vld [vmem:[%s4] sm:$0x1]
    %v274 = vlaneseq
    %v275 = vshrl.u32 %v274, 7
    %v276 = vsub.s32 0, %v275
    %v277 = vrot.slane %v272, %v276
    %vm279 = vcmask 121856
    %v281 = vsel %vm279, %v254, 0
    %v284 = vsel %vm279, %v255, 0
    %v287 = vsel %vm279, %v256, 0
    %v290 = vsel %vm279, %v257, 0
    %v293 = vsel %vm279, %v258, 0
    %v296 = vsel %vm279, %v259, 0
    %v299 = vsel %vm279, %v260, 0
    %v302 = vsel %vm279, %v261, 0
    %v305 = vsel %vm279, %v262, 0
    %v308 = vsel %vm279, %v263, 0
    %v311 = vsel %vm279, %v264, 0
    %v314 = vsel %vm279, %v265, 0
    %v317 = vsel %vm279, %v266, 0
    %v320 = vsel %vm279, %v267, 0
    %v323 = vsel %vm279, %v268, 0
    %v326 = vsel %vm279, %v269, 0
    %vm328 = vcmask 1046528
    %v330 = vsel %vm328, %v271, 0
    %332 = vmatprep.subr.mxu0 0.0
    %333 = vmatpush1.msra.mxu0 %v270
    %334 = vmatprep.subr.mxu0 0.0
    %335 = vmatpush1.msra.mxu0 %v330
    %336 = vmatprep.subr.mxu0 0.0
    %337 = vmatpush1.msra.mxu0 0.0
    %338 = vmatprep.subr.mxu0 0.0
    %339 = vmatpush1.msra.mxu0 0.0
    %340 = vmatprep.subr.mxu0 0.0
    %341 = vmatpush1.msra.mxu0 0.0
    %342 = vmatprep.subr.mxu0 0.0
    %343 = vmatpush1.msra.mxu0 0.0
    %344 = vmatprep.subr.mxu0 0.0
    %345 = vmatpush1.msra.mxu0 0.0
    %346 = vmatprep.subr.mxu0 0.0
    %347 = vmatpush1.msra.mxu0 0.0
    %348 = vmatprep.subr.mxu0 0.0
    %349 = vmatpush1.msra.mxu0 0.0
    %350 = vmatprep.subr.mxu0 0.0
    %351 = vmatpush1.msra.mxu0 0.0
    %352 = vmatprep.subr.mxu0 0.0
    %353 = vmatpush1.msra.mxu0 0.0
    %354 = vmatprep.subr.mxu0 0.0
    %355 = vmatpush1.msra.mxu0 0.0
    %356 = vmatprep.subr.mxu0 0.0
    %357 = vmatpush1.msra.mxu0 0.0
    %358 = vmatprep.subr.mxu0 0.0
    %359 = vmatpush1.msra.mxu0 0.0
    %360 = vmatprep.subr.mxu0 0.0
    %361 = vmatpush1.msra.mxu0 0.0
    %362 = vmatprep.subr.mxu0 0.0
    %363 = vmatpush1.msra.mxu0 0.0
    %364 = vmatprep.subr.mxu0 0.0
    %365 = vmatpush1.msra.mxu0 0.0
    %366 = vmatprep.subr.mxu0 0.0
    %367 = vmatpush1.msra.mxu0 0.0
    %368 = vmatprep.subr.mxu0 0.0
    %369 = vmatpush1.msra.mxu0 0.0
    %370 = vmatprep.subr.mxu0 0.0
    %371 = vmatpush1.msra.mxu0 0.0
    %372 = vmatprep.subr.mxu0 0.0
    %373 = vmatpush1.msra.mxu0 0.0
    %374 = vmatprep.subr.mxu0 0.0
    %375 = vmatpush1.msra.mxu0 0.0
    %376 = vmatprep.subr.mxu0 0.0
    %377 = vmatpush1.msra.mxu0 0.0
    %378 = vmatprep.subr.mxu0 0.0
    %379 = vmatpush1.msra.mxu0 0.0
    %380 = vmatprep.subr.mxu0 0.0
    %381 = vmatpush1.msra.mxu0 0.0
    %382 = vmatprep.subr.mxu0 0.0
    %383 = vmatpush1.msra.mxu0 0.0
    %384 = vmatprep.subr.mxu0 0.0
    %385 = vmatpush1.msra.mxu0 0.0
    %386 = vmatprep.subr.mxu0 0.0
    %387 = vmatpush1.msra.mxu0 0.0
    %388 = vmatprep.subr.mxu0 0.0
    %389 = vmatpush1.msra.mxu0 0.0
    %390 = vmatprep.subr.mxu0 0.0
    %391 = vmatpush1.msra.mxu0 0.0
    %392 = vmatprep.subr.mxu0 0.0
    %393 = vmatpush1.msra.mxu0 0.0
    %394 = vmatprep.subr.mxu0 0.0
    %395 = vmatpush1.msra.mxu0 0.0
    %396 = vmatprep.mubr.f32.mxu0 0.0
    %397 = vmatmul.mubr.f32.gmra.mrb[0].mxu0 %v281
    %v398 = vpop.f32.mrb[0].mxu0
    %v399 = vadd.f32 %v277, %v398
    %v400 = vpop.f32.mrb[0].mxu0
    %401 = vmatprep.mubr.f32.mxu0 0.0
    %402 = vmatmul.mubr.f32.gmra.mrb[0].mxu0 %v284
    %v403 = vpop.f32.mrb[0].mxu0
    %v404 = vadd.f32 %v277, %v403
    %v405 = vpop.f32.mrb[0].mxu0
    %406 = vmatprep.mubr.f32.mxu0 0.0
    %407 = vmatmul.mubr.f32.gmra.mrb[0].mxu0 %v287
    %v408 = vpop.f32.mrb[0].mxu0
    %v409 = vadd.f32 %v277, %v408
    %v410 = vpop.f32.mrb[0].mxu0
    %411 = vmatprep.mubr.f32.mxu0 0.0
    %412 = vmatmul.mubr.f32.gmra.mrb[0].mxu0 %v290
    %v413 = vpop.f32.mrb[0].mxu0
    %v414 = vadd.f32 %v277, %v413
    %v415 = vpop.f32.mrb[0].mxu0
    %416 = vmatprep.mubr.f32.mxu0 0.0
    %417 = vmatmul.mubr.f32.gmra.mrb[0].mxu0 %v293
    %v418 = vpop.f32.mrb[0].mxu0
    %v419 = vadd.f32 %v277, %v418
    %v420 = vpop.f32.mrb[0].mxu0
    %421 = vmatprep.mubr.f32.mxu0 0.0
    %422 = vmatmul.mubr.f32.gmra.mrb[0].mxu0 %v296
    %v423 = vpop.f32.mrb[0].mxu0
    %v424 = vadd.f32 %v277, %v423
    %v425 = vpop.f32.mrb[0].mxu0
    %426 = vmatprep.mubr.f32.mxu0 0.0
    %427 = vmatmul.mubr.f32.gmra.mrb[0].mxu0 %v299
    %v428 = vpop.f32.mrb[0].mxu0
    %v429 = vadd.f32 %v277, %v428
    %v430 = vpop.f32.mrb[0].mxu0
    %431 = vmatprep.mubr.f32.mxu0 0.0
    %432 = vmatmul.mubr.f32.gmra.mrb[0].mxu0 %v302
    %v433 = vpop.f32.mrb[0].mxu0
    %v434 = vadd.f32 %v277, %v433
    %v435 = vpop.f32.mrb[0].mxu0
    %436 = vmatprep.mubr.f32.mxu0 0.0
    %437 = vmatmul.mubr.f32.gmra.mrb[0].mxu0 %v305
    %v438 = vpop.f32.mrb[0].mxu0
    %v439 = vadd.f32 %v277, %v438
    %v440 = vpop.f32.mrb[0].mxu0
    %441 = vmatprep.mubr.f32.mxu0 0.0
    %442 = vmatmul.mubr.f32.gmra.mrb[0].mxu0 %v308
    %v443 = vpop.f32.mrb[0].mxu0
    %v444 = vadd.f32 %v277, %v443
    %v445 = vpop.f32.mrb[0].mxu0
    %446 = vmatprep.mubr.f32.mxu0 0.0
    %447 = vmatmul.mubr.f32.gmra.mrb[0].mxu0 %v311
    %v448 = vpop.f32.mrb[0].mxu0
    %v449 = vadd.f32 %v277, %v448
    %v450 = vpop.f32.mrb[0].mxu0
    %451 = vmatprep.mubr.f32.mxu0 0.0
    %452 = vmatmul.mubr.f32.gmra.mrb[0].mxu0 %v314
    %v453 = vpop.f32.mrb[0].mxu0
    %v454 = vadd.f32 %v277, %v453
    %v455 = vpop.f32.mrb[0].mxu0
    %456 = vmatprep.mubr.f32.mxu0 0.0
    %457 = vmatmul.mubr.f32.gmra.mrb[0].mxu0 %v317
    %v458 = vpop.f32.mrb[0].mxu0
    %v459 = vadd.f32 %v277, %v458
    %v460 = vpop.f32.mrb[0].mxu0
    %461 = vmatprep.mubr.f32.mxu0 0.0
    %462 = vmatmul.mubr.f32.gmra.mrb[0].mxu0 %v320
    %v463 = vpop.f32.mrb[0].mxu0
    %v464 = vadd.f32 %v277, %v463
    %v465 = vpop.f32.mrb[0].mxu0
    %466 = vmatprep.mubr.f32.mxu0 0.0
    %467 = vmatmul.mubr.f32.gmra.mrb[0].mxu0 %v323
    %v468 = vpop.f32.mrb[0].mxu0
    %v469 = vadd.f32 %v277, %v468
    %v470 = vpop.f32.mrb[0].mxu0
    %471 = vmatprep.mubr.f32.mxu0 0.0
    %472 = vmatmul.mubr.f32.gmra.mrb[0].mxu0 %v326
    %v473 = vpop.f32.mrb[0].mxu0
    %v474 = vadd.f32 %v277, %v473
    %v475 = vpop.f32.mrb[0].mxu0
    %476 = vdwg.mxu0
    %v477 = vmax.f32 %v399, 0.0
    %v478 = vmax.f32 %v404, 0.0
    %v479 = vmax.f32 %v409, 0.0
    %v480 = vmax.f32 %v414, 0.0
    %v481 = vmax.f32 %v419, 0.0
    %v482 = vmax.f32 %v424, 0.0
    %v483 = vmax.f32 %v429, 0.0
    %v484 = vmax.f32 %v434, 0.0
    %v485 = vmax.f32 %v439, 0.0
    %v486 = vmax.f32 %v444, 0.0
    %v487 = vmax.f32 %v449, 0.0
    %v488 = vmax.f32 %v454, 0.0
    %v489 = vmax.f32 %v459, 0.0
    %v490 = vmax.f32 %v464, 0.0
    %v491 = vmax.f32 %v469, 0.0
    %v492 = vmax.f32 %v474, 0.0
    %v493 = vld [vmem:[%s5] sm:$0x1]
    %v494 = vld [vmem:[#allocation2] sm:$0x1]
    %496 = vset.pattern.permute.xlu0 0
    %497 = vperm.xlu0 %496, %v494
    %v498 = vpop.permute.xlu0 %497
    %v500 = vlaneseq
    %v501 = vshrl.u32 %v500, 7
    %v502 = vsub.s32 0, %v501
    %v503 = vrot.slane %v498, %v502
    %v505 = vsel %vm279, %v493, 0
    %v508 = vsel %vm279, %v477, 0
    %v511 = vsel %vm279, %v478, 0
    %v514 = vsel %vm279, %v479, 0
    %v517 = vsel %vm279, %v480, 0
    %v520 = vsel %vm279, %v481, 0
    %v523 = vsel %vm279, %v482, 0
    %v526 = vsel %vm279, %v483, 0
    %v529 = vsel %vm279, %v484, 0
    %v532 = vsel %vm279, %v485, 0
    %v535 = vsel %vm279, %v486, 0
    %v538 = vsel %vm279, %v487, 0
    %v541 = vsel %vm279, %v488, 0
    %v544 = vsel %vm279, %v489, 0
    %v547 = vsel %vm279, %v490, 0
    %v550 = vsel %vm279, %v491, 0
    %v553 = vsel %vm279, %v492, 0
    %555 = vmatprep.subr.mxu0 0.0
    %556 = vmatpush1.xpose.msra.mxu0 %v508
    %557 = vmatprep.subr.mxu0 0.0
    %558 = vmatpush1.xpose.msra.mxu0 %v511
    %559 = vmatprep.subr.mxu0 0.0
    %560 = vmatpush1.xpose.msra.mxu0 %v514
    %561 = vmatprep.subr.mxu0 0.0
    %562 = vmatpush1.xpose.msra.mxu0 %v517
    %563 = vmatprep.subr.mxu0 0.0
    %564 = vmatpush1.xpose.msra.mxu0 %v520
    %565 = vmatprep.subr.mxu0 0.0
    %566 = vmatpush1.xpose.msra.mxu0 %v523
    %567 = vmatprep.subr.mxu0 0.0
    %568 = vmatpush1.xpose.msra.mxu0 %v526
    %569 = vmatprep.subr.mxu0 0.0
    %570 = vmatpush1.xpose.msra.mxu0 %v529
    %571 = vmatprep.subr.mxu0 0.0
    %572 = vmatpush1.xpose.msra.mxu0 %v532
    %573 = vmatprep.subr.mxu0 0.0
    %574 = vmatpush1.xpose.msra.mxu0 %v535
    %575 = vmatprep.subr.mxu0 0.0
    %576 = vmatpush1.xpose.msra.mxu0 %v538
    %577 = vmatprep.subr.mxu0 0.0
    %578 = vmatpush1.xpose.msra.mxu0 %v541
    %579 = vmatprep.subr.mxu0 0.0
    %580 = vmatpush1.xpose.msra.mxu0 %v544
    %581 = vmatprep.subr.mxu0 0.0
    %582 = vmatpush1.xpose.msra.mxu0 %v547
    %583 = vmatprep.subr.mxu0 0.0
    %584 = vmatpush1.xpose.msra.mxu0 %v550
    %585 = vmatprep.subr.mxu0 0.0
    %586 = vmatpush1.xpose.msra.mxu0 %v553
    %587 = vmatprep.subr.mxu0 0.0
    %588 = vmatpush1.xpose.msra.mxu0 0.0
    %589 = vmatprep.subr.mxu0 0.0
    %590 = vmatpush1.xpose.msra.mxu0 0.0
    %591 = vmatprep.subr.mxu0 0.0
    %592 = vmatpush1.xpose.msra.mxu0 0.0
    %593 = vmatprep.subr.mxu0 0.0
    %594 = vmatpush1.xpose.msra.mxu0 0.0
    %595 = vmatprep.subr.mxu0 0.0
    %596 = vmatpush1.xpose.msra.mxu0 0.0
    %597 = vmatprep.subr.mxu0 0.0
    %598 = vmatpush1.xpose.msra.mxu0 0.0
    %599 = vmatprep.subr.mxu0 0.0
    %600 = vmatpush1.xpose.msra.mxu0 0.0
    %601 = vmatprep.subr.mxu0 0.0
    %602 = vmatpush1.xpose.msra.mxu0 0.0
    %603 = vmatprep.subr.mxu0 0.0
    %604 = vmatpush1.xpose.msra.mxu0 0.0
    %605 = vmatprep.subr.mxu0 0.0
    %606 = vmatpush1.xpose.msra.mxu0 0.0
    %607 = vmatprep.subr.mxu0 0.0
    %608 = vmatpush1.xpose.msra.mxu0 0.0
    %609 = vmatprep.subr.mxu0 0.0
    %610 = vmatpush1.xpose.msra.mxu0 0.0
    %611 = vmatprep.subr.mxu0 0.0
    %612 = vmatpush1.xpose.msra.mxu0 0.0
    %613 = vmatprep.subr.mxu0 0.0
    %614 = vmatpush1.xpose.msra.mxu0 0.0
    %615 = vmatprep.subr.mxu0 0.0
    %616 = vmatpush1.xpose.msra.mxu0 0.0
    %617 = vmatprep.subr.mxu0 0.0
    %618 = vmatpush1.xpose.msra.mxu0 0.0
    %619 = vmatprep.mubr.f32.mxu0 0.0
    %620 = vmatmul.mubr.f32.gmra.mrb[0].mxu0 %v505
    %v621 = vpop.f32.mrb[0].mxu0
    %v622 = vadd.f32 %v503, %v621
    %v623 = vpop.f32.mrb[0].mxu0
    %624 = vdwg.mxu0
    %v625 = vmul.f32 %v622, 0.5
    %v626 = vtanh.pop %v625
    %v627 = vadd.f32 %v626, 1.0
    %v628 = vmul.f32 %v627, 0.5
    %629 = vst [vmem:[#allocation3] sm:$0x1] %v628
    // Predicated region
    $region30: #{tpu_custom_call.1} parent=1 // pred_check
      _
    $region31: #{tpu_custom_call.1} parent=1 // pred_check_branch
      %631 = sbr.rel (0) target = $region33
    $region32: #{tpu_custom_call.1} parent=1 // pred_region
      %s633 = ssub.s32 16, 16
      %634 = vsyncadd [#allocation4], %s633
      %s636 = sshll.u32 [#allocation3], 4
      %s637 = int_to_ptr.vmem [resolvable:$true] %s636
      %639 = dma.vmem_to_hbm [thread:$0]  %s637, 16, %s7, [#allocation4]
    $region33: #{tpu_custom_call.1} parent=1 // pred_fallthru
      _
    // Predicated region
    $region34: #{tpu_custom_call.1} parent=1 // pred_check
      _
    $region35: #{tpu_custom_call.1} parent=1 // pred_check_branch
      %641 = sbr.rel (0) target = $region37
    $region36: #{tpu_custom_call.1} parent=1 // pred_region
      %642 = dma.done [#allocation4], 16
    $region37: #{tpu_custom_call.1} parent=1 // pred_fallthru
      _
    %643 = vsyncpa [#allocation4], 1

</llo_original>
